<compile_context>
chip_gen: v7x
topology: tpu7x:2x2x1
jax: 0.10.0
libtpu: 0.0.40
codegen_flags: <defaults>
</compile_context>

<pallas_src>
import functools
import math

import jax
import jax.numpy as jnp
import numpy as np
from jax.experimental import pallas as pl
from jax.experimental.pallas import tpu as pltpu


# ----------------------------------------------------------------------------
# Fused kernel: pointwise convs (q / k / emb-folded values) + KxK window gather
# + per-pixel softmax attention, all on one VMEM-resident padded image.
# Layout: channels on sublanes, flattened padded pixels on lanes (lane-dense).
# ----------------------------------------------------------------------------
def _fused_stem_kernel(w_ref, x_ref, o_ref, *, cout, kernel_size, padding, wp, n_out):
    K = kernel_size
    C = cout

    x = x_ref[0]                     # (Cin, L)   flattened padded image, pixels on lanes
    w = w_ref[...]                   # ((2+KK)*Cout, Cin)   rows = [wq ; wk ; W_eff[0..KK-1]]

    # One MXU matmul produces q/k/mixed-value features for every padded pixel,
    # with the flattened pixel axis on the lane dimension.
    feat = jnp.dot(w, x, preferred_element_type=jnp.float32)   # ((2+KK)*C, L)

    # Query lives at the window center: anchor a -> padded pixel a + p*Wp + p.
    off_q = padding * wp + padding
    q = feat[0:C, off_q:off_q + n_out]                         # (C, n_out)

    # Static KxK window gather: offset (i, j) == shift of i*Wp + j in flat space.
    logits = []
    vals = []
    for i in range(K):
        for j in range(K):
            kk = i * K + j
            off = i * wp + j
            k_ij = feat[C:2 * C, off:off + n_out]                      # (C, n_out)
            v_ij = feat[(2 + kk) * C:(3 + kk) * C, off:off + n_out]    # (C, n_out)
            logits.append(q * k_ij)
            vals.append(v_ij)

    # Numerically-stable softmax over the KK window positions.
    # Tree-reduce the max to cut the VPU dependency depth from KK-1 to ceil(log2(KK)).
    terms = list(logits)
    while len(terms) > 1:
        nxt = [jnp.maximum(terms[t], terms[t + 1]) for t in range(0, len(terms) - 1, 2)]
        if len(terms) % 2:
            nxt.append(terms[-1])
        terms = nxt
    mx = terms[0]

    e0 = jnp.exp(logits[0] - mx)
    den = e0
    num = e0 * vals[0]
    for t, v_ij in zip(logits[1:], vals[1:]):
        e = jnp.exp(t - mx)               # EUP
        den = den + e
        num = num + e * v_ij

    o_ref[0] = (num * pl.reciprocal(den, approx=False)).astype(o_ref.dtype)


# ----------------------------------------------------------------------------
# Wrapper: fold mixture weights, build the flattened padded image, launch kernel.
# ----------------------------------------------------------------------------
def attention_stem_forward(x_nchw, params, *, kernel_size, stride, padding, groups, m):
    assert stride == 1, "output H,W == input H,W only holds for stride=1"
    K = kernel_size
    KK = K * K
    p = padding
    assert 2 * p >= K - 1
    B, Cin, H, W = x_nchw.shape
    Cout = params["wq"].shape[0]
    assert Cout % groups == 0

    Wp = W + 2 * p
    # Output anchors: output pixel (h, w) <-> flat index h*Wp + w of the padded image
    # (top-left corner of its KxK window).  We compute H*Wp anchors (the w >= W ones are
    # garbage and sliced away afterwards) so the result reshapes straight to (H, Wp).
    n_out = H * Wp
    max_off = max(p * Wp + p, (K - 1) * (Wp + 1))
    rows_total = -(-(n_out + max_off) // Wp)          # ceil: keep every static slice in-bounds
    pad_bottom = rows_total - (p + H)
    L = rows_total * Wp

    # Rough per-step VMEM working-set estimate (f32): blocks are double-buffered by Pallas.
    vmem_est = 4 * (2 * Cin * L + 2 * (2 + KK) * Cout * Cin + 2 * Cout * n_out
                    + (2 + KK) * Cout * L + 3 * KK * Cout * n_out)
    # TODO(synk): for feature maps where this exceeds ~12 MiB (v5e scoped default is 16 MiB,
    # v7x physical VMEM is 64 MiB), switch to a row-block grid with halo'd tiles
    # (memory_space=pl.ANY + pltpu.make_async_copy) instead of whole-image blocks.
    assert vmem_est < 12 * 1024 * 1024, "image too large for whole-image VMEM blocks"

    # Padded, flattened input (NCHW in, no layout transposes anywhere).
    xp = jnp.pad(x_nchw, ((0, 0), (0, 0), (p, pad_bottom), (p, p)))
    x_flat = xp.reshape(B, Cin, L)

    # Relative-position mixture softmax, folded into the value conv weights
    # (removes the m axis from all large tensors).
    emb_logit_a = params["emb_mix"] @ params["emb_a"]                 # (m, K)
    emb_logit_b = params["emb_mix"] @ params["emb_b"]                 # (m, K)
    emb = emb_logit_a[:, :, None] + emb_logit_b[:, None, :]           # (m, K, K)
    emb_sm = jax.nn.softmax(emb.reshape(m, KK), axis=0)               # (m, KK)
    w_eff = jnp.einsum('mk,moc->koc', emb_sm, params["wv"])           # (KK, Cout, Cin)
    w_all = jnp.concatenate([params["wq"][None], params["wk"][None], w_eff], axis=0)
    w_all = w_all.reshape((2 + KK) * Cout, Cin)                       # [wq; wk; W_eff[kk]]

    kernel = functools.partial(_fused_stem_kernel, cout=Cout, kernel_size=K,
                               padding=p, wp=Wp, n_out=n_out)

    out_flat = pl.pallas_call(
        kernel,
        out_shape=jax.ShapeDtypeStruct((B, Cout, n_out), jnp.float32),
        grid=(B,),
        in_specs=[
            pl.BlockSpec(((2 + KK) * Cout, Cin), lambda b: (0, 0)),   # weights (resident)
            pl.BlockSpec((1, Cin, L), lambda b: (b, 0, 0)),           # one padded image
        ],
        out_specs=pl.BlockSpec((1, Cout, n_out), lambda b: (b, 0, 0)),
        compiler_params=pltpu.CompilerParams(
            dimension_semantics=("parallel",),                        # split batch across cores
        ),
    )(w_all, x_flat)

    # Valid anchors are the first W columns of each Wp-long row.
    out = out_flat.reshape(B, Cout, H, Wp)[:, :, :, :W]               # (B, Cout, H, W) NCHW
    return out


# ----------------------------------------------------------------------------
# Pure-JAX reference mirroring the PyTorch forward (NCHW), for validation.
# ----------------------------------------------------------------------------
def reference_forward(x, params, *, kernel_size, stride, padding, groups, m):
    del stride, groups
    B, Cin, H, W = x.shape
    K = kernel_size
    hp = jax.lax.Precision.HIGHEST
    xp = jnp.pad(x, ((0, 0), (0, 0), (padding, padding), (padding, padding)))
    q = jnp.einsum('oc,bchw->bohw', params["wq"], x, precision=hp)
    k = jnp.einsum('oc,bchw->bohw', params["wk"], xp, precision=hp)
    v = jnp.einsum('moc,bchw->mbohw', params["wv"], xp, precision=hp)
    k_unf = jnp.stack([k[:, :, i:i + H, j:j + W]
                       for i in range(K) for j in range(K)], axis=-1)            # (B,C,H,W,KK)
    v_unf = jnp.stack([v[:, :, :, i:i + H, j:j + W]
                       for i in range(K) for j in range(K)], axis=-1)            # (m,B,C,H,W,KK)
    emb_logit_a = params["emb_mix"] @ params["emb_a"]
    emb_logit_b = params["emb_mix"] @ params["emb_b"]
    emb = emb_logit_a[:, :, None] + emb_logit_b[:, None, :]
    emb = jax.nn.softmax(emb.reshape(m, K * K), axis=0)
    vw = jnp.sum(emb[:, None, None, None, None, :] * v_unf, axis=0)              # (B,C,H,W,KK)
    attn = jax.nn.softmax(q[..., None] * k_unf, axis=-1)
    return jnp.sum(attn * vw, axis=-1)                                           # (B,C,H,W)


if __name__ == "__main__":
    key = jax.random.PRNGKey(0)
    B, Cin, H, W = 2, 4, 16, 16
    Cout, K, stride, padding, groups, m = 8, 3, 1, 1, 2, 4

    keys = jax.random.split(key, 7)
    x = jax.random.normal(keys[0], (B, Cin, H, W), jnp.float32)
    std = math.sqrt(2.0 / Cout)  # kaiming_normal_, mode='fan_out', relu
    params = {
        "wq": std * jax.random.normal(keys[1], (Cout, Cin), jnp.float32),
        "wk": std * jax.random.normal(keys[2], (Cout, Cin), jnp.float32),
        "wv": std * jax.random.normal(keys[3], (m, Cout, Cin), jnp.float32),
        "emb_a": jax.random.normal(keys[4], (Cout // groups, K), jnp.float32),
        "emb_b": jax.random.normal(keys[5], (Cout // groups, K), jnp.float32),
        "emb_mix": jax.random.normal(keys[6], (m, Cout // groups), jnp.float32),
    }

    out = attention_stem_forward(x, params, kernel_size=K, stride=stride,
                                 padding=padding, groups=groups, m=m)
    out = jax.block_until_ready(out)
    assert out.shape == (B, Cout, H, W)

    ref = reference_forward(x, params, kernel_size=K, stride=stride,
                            padding=padding, groups=groups, m=m)
    np.testing.assert_allclose(np.asarray(out), np.asarray(ref), rtol=1e-3, atol=1e-3)

    print("KERNEL_OK")
</pallas_src>

<mosaic_0001>
module attributes {stable_mosaic.version = 11 : i64} {
  func.func @_fused_stem_kernel(%arg0: i32, %arg1: memref<88x4xf32, #tpu.memory_space<vmem>>, %arg2: memref<1x4x342xf32, #tpu.memory_space<vmem>>, %arg3: memref<1x8x288xf32, #tpu.memory_space<vmem>>) attributes {dimension_semantics = [#tpu.dimension_semantics<parallel>], iteration_bounds = array<i64: 2>, scalar_prefetch = 0 : i64, scratch_operands = 0 : i64, tpu.core_type = #tpu.core_type<tc>, window_params = [{pipeline_mode = #tpu.pipeline_mode<synchronous>, transform_indices = @transform_0, window_bounds = array<i64: 88, 4>}, {transform_indices = @transform_1, window_bounds = array<i64: 1, 4, 342>}, {transform_indices = @transform_2, window_bounds = array<i64: 1, 8, 288>}]} {
    %c0 = arith.constant 0 : index
    %c0_0 = arith.constant 0 : index
    %c0_1 = arith.constant 0 : index
    %0 = vector.load %arg2[%c0, %c0_0, %c0_1] : memref<1x4x342xf32, #tpu.memory_space<vmem>>, vector<1x4x342xf32>
    %1 = vector.shape_cast %0 : vector<1x4x342xf32> to vector<4x342xf32>
    %c0_2 = arith.constant 0 : index
    %c0_3 = arith.constant 0 : index
    %2 = vector.load %arg1[%c0_2, %c0_3] : memref<88x4xf32, #tpu.memory_space<vmem>>, vector<88x4xf32>
    %cst = arith.constant dense<0.000000e+00> : vector<88x342xf32>
    %3 = tpu.matmul %2, %1, %cst {dimension_numbers = #tpu.dot_dimension_numbers<[1], [0], [0], [1], [0, 0, 1, 1], [], []>} : vector<88x4xf32>, vector<4x342xf32>, vector<88x342xf32> -> vector<88x342xf32>
    %4 = vector.extract_strided_slice %3 {offsets = [0, 19], sizes = [8, 288], strides = [1, 1]} : vector<88x342xf32> to vector<8x288xf32>
    %5 = vector.extract_strided_slice %3 {offsets = [8, 0], sizes = [8, 288], strides = [1, 1]} : vector<88x342xf32> to vector<8x288xf32>
    %6 = vector.extract_strided_slice %3 {offsets = [16, 0], sizes = [8, 288], strides = [1, 1]} : vector<88x342xf32> to vector<8x288xf32>
    %7 = arith.mulf %4, %5 : vector<8x288xf32>
    %8 = vector.extract_strided_slice %3 {offsets = [8, 1], sizes = [8, 288], strides = [1, 1]} : vector<88x342xf32> to vector<8x288xf32>
    %9 = vector.extract_strided_slice %3 {offsets = [24, 1], sizes = [8, 288], strides = [1, 1]} : vector<88x342xf32> to vector<8x288xf32>
    %10 = arith.mulf %4, %8 : vector<8x288xf32>
    %11 = vector.extract_strided_slice %3 {offsets = [8, 2], sizes = [8, 288], strides = [1, 1]} : vector<88x342xf32> to vector<8x288xf32>
    %12 = vector.extract_strided_slice %3 {offsets = [32, 2], sizes = [8, 288], strides = [1, 1]} : vector<88x342xf32> to vector<8x288xf32>
    %13 = arith.mulf %4, %11 : vector<8x288xf32>
    %14 = vector.extract_strided_slice %3 {offsets = [8, 18], sizes = [8, 288], strides = [1, 1]} : vector<88x342xf32> to vector<8x288xf32>
    %15 = vector.extract_strided_slice %3 {offsets = [40, 18], sizes = [8, 288], strides = [1, 1]} : vector<88x342xf32> to vector<8x288xf32>
    %16 = arith.mulf %4, %14 : vector<8x288xf32>
    %17 = vector.extract_strided_slice %3 {offsets = [8, 19], sizes = [8, 288], strides = [1, 1]} : vector<88x342xf32> to vector<8x288xf32>
    %18 = vector.extract_strided_slice %3 {offsets = [48, 19], sizes = [8, 288], strides = [1, 1]} : vector<88x342xf32> to vector<8x288xf32>
    %19 = arith.mulf %4, %17 : vector<8x288xf32>
    %20 = vector.extract_strided_slice %3 {offsets = [8, 20], sizes = [8, 288], strides = [1, 1]} : vector<88x342xf32> to vector<8x288xf32>
    %21 = vector.extract_strided_slice %3 {offsets = [56, 20], sizes = [8, 288], strides = [1, 1]} : vector<88x342xf32> to vector<8x288xf32>
    %22 = arith.mulf %4, %20 : vector<8x288xf32>
    %23 = vector.extract_strided_slice %3 {offsets = [8, 36], sizes = [8, 288], strides = [1, 1]} : vector<88x342xf32> to vector<8x288xf32>
    %24 = vector.extract_strided_slice %3 {offsets = [64, 36], sizes = [8, 288], strides = [1, 1]} : vector<88x342xf32> to vector<8x288xf32>
    %25 = arith.mulf %4, %23 : vector<8x288xf32>
    %26 = vector.extract_strided_slice %3 {offsets = [8, 37], sizes = [8, 288], strides = [1, 1]} : vector<88x342xf32> to vector<8x288xf32>
    %27 = vector.extract_strided_slice %3 {offsets = [72, 37], sizes = [8, 288], strides = [1, 1]} : vector<88x342xf32> to vector<8x288xf32>
    %28 = arith.mulf %4, %26 : vector<8x288xf32>
    %29 = vector.extract_strided_slice %3 {offsets = [8, 38], sizes = [8, 288], strides = [1, 1]} : vector<88x342xf32> to vector<8x288xf32>
    %30 = vector.extract_strided_slice %3 {offsets = [80, 38], sizes = [8, 288], strides = [1, 1]} : vector<88x342xf32> to vector<8x288xf32>
    %31 = arith.mulf %4, %29 : vector<8x288xf32>
    %32 = arith.maximumf %7, %10 : vector<8x288xf32>
    %33 = arith.maximumf %13, %16 : vector<8x288xf32>
    %34 = arith.maximumf %19, %22 : vector<8x288xf32>
    %35 = arith.maximumf %25, %28 : vector<8x288xf32>
    %36 = arith.maximumf %32, %33 : vector<8x288xf32>
    %37 = arith.maximumf %34, %35 : vector<8x288xf32>
    %38 = arith.maximumf %36, %37 : vector<8x288xf32>
    %39 = arith.maximumf %38, %31 : vector<8x288xf32>
    %40 = arith.subf %7, %39 : vector<8x288xf32>
    %41 = math.exp %40 : vector<8x288xf32>
    %42 = arith.mulf %41, %6 : vector<8x288xf32>
    %43 = arith.subf %10, %39 : vector<8x288xf32>
    %44 = math.exp %43 : vector<8x288xf32>
    %45 = arith.addf %41, %44 : vector<8x288xf32>
    %46 = arith.mulf %44, %9 : vector<8x288xf32>
    %47 = arith.addf %42, %46 : vector<8x288xf32>
    %48 = arith.subf %13, %39 : vector<8x288xf32>
    %49 = math.exp %48 : vector<8x288xf32>
    %50 = arith.addf %45, %49 : vector<8x288xf32>
    %51 = arith.mulf %49, %12 : vector<8x288xf32>
    %52 = arith.addf %47, %51 : vector<8x288xf32>
    %53 = arith.subf %16, %39 : vector<8x288xf32>
    %54 = math.exp %53 : vector<8x288xf32>
    %55 = arith.addf %50, %54 : vector<8x288xf32>
    %56 = arith.mulf %54, %15 : vector<8x288xf32>
    %57 = arith.addf %52, %56 : vector<8x288xf32>
    %58 = arith.subf %19, %39 : vector<8x288xf32>
    %59 = math.exp %58 : vector<8x288xf32>
    %60 = arith.addf %55, %59 : vector<8x288xf32>
    %61 = arith.mulf %59, %18 : vector<8x288xf32>
    %62 = arith.addf %57, %61 : vector<8x288xf32>
    %63 = arith.subf %22, %39 : vector<8x288xf32>
    %64 = math.exp %63 : vector<8x288xf32>
    %65 = arith.addf %60, %64 : vector<8x288xf32>
    %66 = arith.mulf %64, %21 : vector<8x288xf32>
    %67 = arith.addf %62, %66 : vector<8x288xf32>
    %68 = arith.subf %25, %39 : vector<8x288xf32>
    %69 = math.exp %68 : vector<8x288xf32>
    %70 = arith.addf %65, %69 : vector<8x288xf32>
    %71 = arith.mulf %69, %24 : vector<8x288xf32>
    %72 = arith.addf %67, %71 : vector<8x288xf32>
    %73 = arith.subf %28, %39 : vector<8x288xf32>
    %74 = math.exp %73 : vector<8x288xf32>
    %75 = arith.addf %70, %74 : vector<8x288xf32>
    %76 = arith.mulf %74, %27 : vector<8x288xf32>
    %77 = arith.addf %72, %76 : vector<8x288xf32>
    %78 = arith.subf %31, %39 : vector<8x288xf32>
    %79 = math.exp %78 : vector<8x288xf32>
    %80 = arith.addf %75, %79 : vector<8x288xf32>
    %81 = arith.mulf %79, %30 : vector<8x288xf32>
    %82 = arith.addf %77, %81 : vector<8x288xf32>
    %83 = tpu.reciprocal %80 : vector<8x288xf32> -> vector<8x288xf32>
    %84 = arith.mulf %82, %83 : vector<8x288xf32>
    %c0_4 = arith.constant 0 : index
    %c0_5 = arith.constant 0 : index
    %c0_6 = arith.constant 0 : index
    %85 = vector.load %arg3[%c0_4, %c0_5, %c0_6] : memref<1x8x288xf32, #tpu.memory_space<vmem>>, vector<1x8x288xf32>
    %86 = vector.shape_cast %85 : vector<1x8x288xf32> to vector<8x288xf32>
    %87 = vector.shape_cast %84 : vector<8x288xf32> to vector<1x8x288xf32>
    tpu.vector_store %arg3[%c0_4, %c0_5, %c0_6], %87 {strides = array<i32>} : memref<1x8x288xf32, #tpu.memory_space<vmem>>, vector<1x8x288xf32>,
    return
  }
  func.func @transform_0(%arg0: i32) -> (i32, i32) {
    %c0_i32 = arith.constant 0 : i32
    %c0_i32_0 = arith.constant 0 : i32
    %c0_i32_1 = arith.constant 0 : i32
    return %c0_i32, %c0_i32_0 : i32, i32
  }
  func.func @transform_1(%arg0: i32) -> (i32, i32, i32) {
    %c0_i32 = arith.constant 0 : i32
    %c0_i32_0 = arith.constant 0 : i32
    %c0_i32_1 = arith.constant 0 : i32
    return %arg0, %c0_i32, %c0_i32_0 : i32, i32, i32
  }
  func.func @transform_2(%arg0: i32) -> (i32, i32, i32) {
    %c0_i32 = arith.constant 0 : i32
    %c0_i32_0 = arith.constant 0 : i32
    %c0_i32_1 = arith.constant 0 : i32
    return %arg0, %c0_i32, %c0_i32_0 : i32, i32, i32
  }
}

</mosaic_0001>

<llo_original>
// kernel: tpu_custom_call.1
$region0: #{tpu_custom_call.1}
  #allocation0 [shape = 'u32[]', space=smem, size = 0x4, offset = 0x4, fixed_abs, tag = 'smem constant byte address 0x4 - core index']
  #allocation1 [shape = 'u32[144,128]{1,0:T(1,128)}', space=vmem, size = 0x12000, scoped, tag = 'internal scratch']
  %s0 = inlined_call_operand.vmem [shape: f32[88,4], index: 0, kind: input, shape index: {}]
  %s1 = inlined_call_operand.vmem [shape: f32[2,4,342], index: 1, kind: input, shape index: {}]
  %s2 = inlined_call_operand.hbm [shape: f32[2,8,288], index: 2, kind: output, shape index: {}]
  %s3 = sld [smem:[#allocation0]]
  $region41: #{tpu_custom_call.1} parent=0
    _
  %s5 = ssub.s32 1, %s3
  %s6 = scalar_select 0, %s5, %s3
  $region1: #{tpu_custom_call.1} parent=0
    #allocation2 [shape = 'u8[24576]{0}', space=vmem, size = 0x6000, scoped, tag = 'output window, operand 0']
    #allocation3 [shape = 's32[2]{0}', space=sflag, size = 0x8, scoped, tag = 'scoped memory for tpu_custom_call.1']
    %7 = vsyncpa [#allocation3], 0
    %s8 = scalar_lea.sflag [#allocation3], 1
    %9 = vsyncpa %s8, 0
    loop: start=0, step=1, limit=4
    $region2: #{tpu_custom_call.1} parent=1 // loop_pre_header
      _
    $region3: #{tpu_custom_call.1} parent=1 // loop_header
      %s11 = sphi 0, %s15
      %p12 = scmp.ge.s32.totalorder %s11, 4
      %s19 = sphi 0, %s19
      %s21 = sphi 0, %s19
      %s22 = sphi 0, %s21
      %s36 = sphi 0, %s22
      %s42 = sphi 0, %s44
      %s45 = sphi 0, %s42
      %s46 = sphi 0, %s45
      %s62 = sphi 0, %s46
      %s68 = sphi 0, %s70
      %s71 = sphi 0, %s68
      %s72 = sphi 0, %s71
      %s88 = sphi 0, %s72
    $region4: #{tpu_custom_call.1} parent=1 // loop_header_branch
      %14 = sbr.rel (%p12) target = $region8
    $region5: #{tpu_custom_call.1} parent=1 // loop_body
      %s16 = ssub.s32 %s11, 1
      %s17 = ssub.s32 %s11, 2
      %s18 = sadd.s32 %s11, 1
      %s20 = sadd.s32 %s19, 1
      %p23 = scmp.eq.s32.totalorder %s11, 1
      %p24 = scmp.ne.s32.totalorder %s19, %s21
      %p25 = scmp.eq.s32.totalorder %s11, 0
      %p26 = por %p24, %p25
      %p27 = scmp.ne.s32.totalorder %s19, %s21
      %p28 = scmp.eq.s32.totalorder %s16, 1
      %p29 = por %p27, %p28
      %p30 = scmp.ne.s32.totalorder %s21, %s22
      %p31 = scmp.eq.s32.totalorder %s16, 0
      %p32 = por %p30, %p31
      %p33 = scmp.ne.s32.totalorder %s21, %s22
      %p34 = scmp.eq.s32.totalorder %s17, 1
      %p35 = por %p33, %p34
      %p37 = scmp.ne.s32.totalorder %s22, %s36
      %p38 = scmp.eq.s32.totalorder %s17, 0
      %p39 = por %p37, %p38
      %s40 = ssub.s32 %s11, %s18
      %p41 = scmp.eq.s32.totalorder %s40, 0
      %s43 = sadd.s32 %s42, 1
      %s44 = scalar_select %p41, %s42, %s43
      %p47 = pneg %p41
      %p48 = scmp.eq.s32.totalorder %s11, 1
      %p49 = por %p47, %p48
      %p50 = scmp.ne.s32.totalorder %s42, %s45
      %p51 = scmp.eq.s32.totalorder %s11, 0
      %p52 = por %p50, %p51
      %p53 = scmp.ne.s32.totalorder %s42, %s45
      %p54 = scmp.eq.s32.totalorder %s16, 1
      %p55 = por %p53, %p54
      %p56 = scmp.ne.s32.totalorder %s45, %s46
      %p57 = scmp.eq.s32.totalorder %s16, 0
      %p58 = por %p56, %p57
      %p59 = scmp.ne.s32.totalorder %s45, %s46
      %p60 = scmp.eq.s32.totalorder %s17, 1
      %p61 = por %p59, %p60
      %p63 = scmp.ne.s32.totalorder %s46, %s62
      %p64 = scmp.eq.s32.totalorder %s17, 0
      %p65 = por %p63, %p64
      %s66 = ssub.s32 %s11, %s18
      %p67 = scmp.eq.s32.totalorder %s66, 0
      %s69 = sadd.s32 %s68, 1
      %s70 = scalar_select %p67, %s68, %s69
      %p73 = pneg %p67
      %p74 = scmp.eq.s32.totalorder %s11, 1
      %p75 = por %p73, %p74
      %p76 = scmp.ne.s32.totalorder %s68, %s71
      %p77 = scmp.eq.s32.totalorder %s11, 0
      %p78 = por %p76, %p77
      %p79 = scmp.ne.s32.totalorder %s68, %s71
      %p80 = scmp.eq.s32.totalorder %s16, 1
      %p81 = por %p79, %p80
      %p82 = scmp.ne.s32.totalorder %s71, %s72
      %p83 = scmp.eq.s32.totalorder %s16, 0
      %p84 = por %p82, %p83
      %p85 = scmp.ne.s32.totalorder %s71, %s72
      %p86 = scmp.eq.s32.totalorder %s17, 1
      %p87 = por %p85, %p86
      %p89 = scmp.ne.s32.totalorder %s72, %s88
      %p90 = scmp.eq.s32.totalorder %s17, 0
      %p91 = por %p89, %p90
      %p92 = scmp.le.s32.totalorder 1, %s11
      %p93 = scmp.lt.s32.totalorder %s11, 3
      %p94 = pnand %p92, %p93
      %p95 = pneg %p94
      // Predicated region
      $region9: #{tpu_custom_call.1} parent=5 // pred_check
        _
      $region10: #{tpu_custom_call.1} parent=5 // pred_check_branch
        %97 = sbr.rel (%p94) target = $region12
      $region11: #{tpu_custom_call.1} parent=5 // pred_region
        %s98 = ssub.s32 %s11, 1
        // Predicated region
        $region13: #{tpu_custom_call.1} parent=11 // pred_check
          %p99 = pneg %p32
        $region14: #{tpu_custom_call.1} parent=11 // pred_check_branch
          %101 = sbr.rel (%p99) target = $region16
        $region15: #{tpu_custom_call.1} parent=11 // pred_region
          _
        $region16: #{tpu_custom_call.1} parent=11 // pred_fallthru
          _
      $region12: #{tpu_custom_call.1} parent=5 // pred_fallthru
        _
      %p102 = scmp.lt.s32.totalorder %s11, 2
      // Predicated region
      $region17: #{tpu_custom_call.1} parent=5 // pred_check
        %p103 = pneg %p102
      $region18: #{tpu_custom_call.1} parent=5 // pred_check_branch
        %105 = sbr.rel (%p103) target = $region20
      $region19: #{tpu_custom_call.1} parent=5 // pred_region
        // Predicated region
        $region21: #{tpu_custom_call.1} parent=19 // pred_check
          %p106 = pneg %p52
        $region22: #{tpu_custom_call.1} parent=19 // pred_check_branch
          %108 = sbr.rel (%p106) target = $region24
        $region23: #{tpu_custom_call.1} parent=19 // pred_region
          %p109 = scmp.lt.s32.totalorder %s11, 1
          %s110 = scalar_select %p109, %s11, 1
          %s111 = smul.addr %s110, 3
          %s112 = smul.addr %s111, 4
          %s113 = scalar_lea.vmem %s1, %s112
        $region24: #{tpu_custom_call.1} parent=19 // pred_fallthru
          _
      $region20: #{tpu_custom_call.1} parent=5 // pred_fallthru
        _
      %p114 = scmp.le.s32.totalorder 1, %s11
      %p115 = scmp.lt.s32.totalorder %s11, 3
      %p116 = pnand %p114, %p115
      %p117 = pneg %p116
      // Predicated region
      $region25: #{tpu_custom_call.1} parent=5 // pred_check
        _
      $region26: #{tpu_custom_call.1} parent=5 // pred_check_branch
        %119 = sbr.rel (%p116) target = $region28
      $region27: #{tpu_custom_call.1} parent=5 // pred_region
        %s120 = ssub.s32 %s11, 1
        %p121 = pneg %p32
        %p122 = pneg %p29
        %p123 = scmp.lt.s32.totalorder %s16, 1
        %s124 = scalar_select %p123, %s16, 1
        %s125 = smul.addr %s124, 3
        %s126 = smul.addr %s125, 4
        %s127 = scalar_lea.vmem %s1, %s126
        %p128 = pneg %p58
        %p129 = pneg %p55
        %p130 = pneg %p84
        %p131 = pneg %p81
        %s132 = sand.u32 %s71, 1
        %s133 = scalar_lea.sflag [#allocation3], %s132
        %s134 = sand.u32 %s71, 1
        %s135 = smul.addr %s134, 24
        %s136 = scalar_lea.vmem [#allocation2], %s135
        %p137 = scmp.lt.s32.totalorder %s16, 1
        %s138 = scalar_select %p137, %s16, 1
        %s139 = smul.addr %s138, 3
        %s140 = smul.addr %s139, 4
        %s141 = scalar_lea.vmem %s1, %s140
        %v142 = vld [vmem:[%s141] sm:$0xff]
        %v143 = vld [vmem:[%s141 + $0x8] sm:$0xf]
        %v144 = vld [vmem:[%s0] sm:$0xff]
        %v145 = vld [vmem:[%s0 + $0x8] sm:$0xff]
        %v146 = vld [vmem:[%s0 + $0x10] sm:$0xff]
        %v147 = vld [vmem:[%s0 + $0x18] sm:$0xff]
        %v148 = vld [vmem:[%s0 + $0x20] sm:$0xff]
        %v149 = vld [vmem:[%s0 + $0x28] sm:$0xff]
        %v150 = vld [vmem:[%s0 + $0x30] sm:$0xff]
        %v151 = vld [vmem:[%s0 + $0x38] sm:$0xff]
        %v152 = vld [vmem:[%s0 + $0x40] sm:$0xff]
        %v153 = vld [vmem:[%s0 + $0x48] sm:$0xff]
        %v154 = vld [vmem:[%s0 + $0x50] sm:$0xff]
        %v157 = vcombine.high %v142, %v142
        %vm158 = vcmask 31744
        %v160 = vsel %vm158, %v144, 0
        %v163 = vsel %vm158, %v145, 0
        %v166 = vsel %vm158, %v146, 0
        %v169 = vsel %vm158, %v147, 0
        %v172 = vsel %vm158, %v148, 0
        %v175 = vsel %vm158, %v149, 0
        %v178 = vsel %vm158, %v150, 0
        %v181 = vsel %vm158, %v151, 0
        %v184 = vsel %vm158, %v152, 0
        %v187 = vsel %vm158, %v153, 0
        %v190 = vsel %vm158, %v154, 0
        %vm192 = vcmask 1043456
        %v193 = vsel %vm192, %v142, 0
        %v195 = vsel %vm192, %v157, 0
        %v197 = vsel %vm192, %v143, 0
        %199 = vmatprep.subr.mxu0 %v195
        %200 = vmatpush1.msra.mxu0 %v193
        %201 = vmatprep.subr.mxu0 0.0
        %202 = vmatpush1.msra.mxu0 0.0
        %203 = vmatprep.subr.mxu0 0.0
        %204 = vmatpush1.msra.mxu0 0.0
        %205 = vmatprep.subr.mxu0 0.0
        %206 = vmatpush1.msra.mxu0 0.0
        %207 = vmatprep.subr.mxu0 0.0
        %208 = vmatpush1.msra.mxu0 0.0
        %209 = vmatprep.subr.mxu0 0.0
        %210 = vmatpush1.msra.mxu0 0.0
        %211 = vmatprep.subr.mxu0 0.0
        %212 = vmatpush1.msra.mxu0 0.0
        %213 = vmatprep.subr.mxu0 0.0
        %214 = vmatpush1.msra.mxu0 0.0
        %215 = vmatprep.subr.mxu0 0.0
        %216 = vmatpush1.msra.mxu0 0.0
        %217 = vmatprep.subr.mxu0 0.0
        %218 = vmatpush1.msra.mxu0 0.0
        %219 = vmatprep.subr.mxu0 0.0
        %220 = vmatpush1.msra.mxu0 0.0
        %221 = vmatprep.subr.mxu0 0.0
        %222 = vmatpush1.msra.mxu0 0.0
        %223 = vmatprep.subr.mxu0 0.0
        %224 = vmatpush1.msra.mxu0 0.0
        %225 = vmatprep.subr.mxu0 0.0
        %226 = vmatpush1.msra.mxu0 0.0
        %227 = vmatprep.subr.mxu0 0.0
        %228 = vmatpush1.msra.mxu0 0.0
        %229 = vmatprep.subr.mxu0 0.0
        %230 = vmatpush1.msra.mxu0 0.0
        %231 = vmatprep.subr.mxu0 0.0
        %232 = vmatpush1.msra.mxu0 0.0
        %233 = vmatprep.subr.mxu0 0.0
        %234 = vmatpush1.msra.mxu0 0.0
        %235 = vmatprep.subr.mxu0 0.0
        %236 = vmatpush1.msra.mxu0 0.0
        %237 = vmatprep.subr.mxu0 0.0
        %238 = vmatpush1.msra.mxu0 0.0
        %239 = vmatprep.subr.mxu0 0.0
        %240 = vmatpush1.msra.mxu0 0.0
        %241 = vmatprep.subr.mxu0 0.0
        %242 = vmatpush1.msra.mxu0 0.0
        %243 = vmatprep.subr.mxu0 0.0
        %244 = vmatpush1.msra.mxu0 0.0
        %245 = vmatprep.subr.mxu0 0.0
        %246 = vmatpush1.msra.mxu0 0.0
        %247 = vmatprep.subr.mxu0 0.0
        %248 = vmatpush1.msra.mxu0 0.0
        %249 = vmatprep.subr.mxu0 0.0
        %250 = vmatpush1.msra.mxu0 0.0
        %251 = vmatprep.subr.mxu0 0.0
        %252 = vmatpush1.msra.mxu0 0.0
        %253 = vmatprep.subr.mxu0 0.0
        %254 = vmatpush1.msra.mxu0 0.0
        %255 = vmatprep.subr.mxu0 0.0
        %256 = vmatpush1.msra.mxu0 0.0
        %257 = vmatprep.subr.mxu0 0.0
        %258 = vmatpush1.msra.mxu0 0.0
        %259 = vmatprep.subr.mxu0 0.0
        %260 = vmatpush1.msra.mxu0 0.0
        %261 = vmatprep.subr.mxu0 0.0
        %262 = vmatpush1.msra.mxu0 0.0
        %263 = vmatprep.mubr.f32.mxu0 0.0
        %264 = vmatmul.mubr.f32.gmra.mrb[0].mxu0 %v160
        %v265 = vpop.f32.mrb[0].mxu0
        %v266 = vadd.f32 0.0, %v265
        %v267 = vpop.f32.mrb[0].mxu0
        %v268 = vadd.f32 0.0, %v267
        %269 = vmatprep.mubr.f32.mxu0 0.0
        %270 = vmatmul.mubr.f32.gmra.mrb[0].mxu0 %v163
        %v271 = vpop.f32.mrb[0].mxu0
        %v272 = vadd.f32 0.0, %v271
        %v273 = vpop.f32.mrb[0].mxu0
        %v274 = vadd.f32 0.0, %v273
        %275 = vmatprep.mubr.f32.mxu0 0.0
        %276 = vmatmul.mubr.f32.gmra.mrb[0].mxu0 %v166
        %v277 = vpop.f32.mrb[0].mxu0
        %v278 = vadd.f32 0.0, %v277
        %v279 = vpop.f32.mrb[0].mxu0
        %v280 = vadd.f32 0.0, %v279
        %281 = vmatprep.mubr.f32.mxu0 0.0
        %282 = vmatmul.mubr.f32.gmra.mrb[0].mxu0 %v169
        %v283 = vpop.f32.mrb[0].mxu0
        %v284 = vadd.f32 0.0, %v283
        %v285 = vpop.f32.mrb[0].mxu0
        %v286 = vadd.f32 0.0, %v285
        %287 = vmatprep.mubr.f32.mxu0 0.0
        %288 = vmatmul.mubr.f32.gmra.mrb[0].mxu0 %v172
        %v289 = vpop.f32.mrb[0].mxu0
        %v290 = vadd.f32 0.0, %v289
        %v291 = vpop.f32.mrb[0].mxu0
        %v292 = vadd.f32 0.0, %v291
        %293 = vmatprep.mubr.f32.mxu0 0.0
        %294 = vmatmul.mubr.f32.gmra.mrb[0].mxu0 %v175
        %v295 = vpop.f32.mrb[0].mxu0
        %v296 = vadd.f32 0.0, %v295
        %v297 = vpop.f32.mrb[0].mxu0
        %v298 = vadd.f32 0.0, %v297
        %299 = vmatprep.mubr.f32.mxu0 0.0
        %300 = vmatmul.mubr.f32.gmra.mrb[0].mxu0 %v178
        %v301 = vpop.f32.mrb[0].mxu0
        %v302 = vadd.f32 0.0, %v301
        %v303 = vpop.f32.mrb[0].mxu0
        %v304 = vadd.f32 0.0, %v303
        %305 = vmatprep.mubr.f32.mxu0 0.0
        %306 = vmatmul.mubr.f32.gmra.mrb[0].mxu0 %v181
        %v307 = vpop.f32.mrb[0].mxu0
        %v308 = vadd.f32 0.0, %v307
        %v309 = vpop.f32.mrb[0].mxu0
        %v310 = vadd.f32 0.0, %v309
        %311 = vmatprep.mubr.f32.mxu0 0.0
        %312 = vmatmul.mubr.f32.gmra.mrb[0].mxu0 %v184
        %v313 = vpop.f32.mrb[0].mxu0
        %v314 = vadd.f32 0.0, %v313
        %v315 = vpop.f32.mrb[0].mxu0
        %v316 = vadd.f32 0.0, %v315
        %317 = vmatprep.mubr.f32.mxu0 0.0
        %318 = vmatmul.mubr.f32.gmra.mrb[0].mxu0 %v187
        %v319 = vpop.f32.mrb[0].mxu0
        %v320 = vadd.f32 0.0, %v319
        %v321 = vpop.f32.mrb[0].mxu0
        %v322 = vadd.f32 0.0, %v321
        %323 = vmatprep.mubr.f32.mxu0 0.0
        %324 = vmatmul.mubr.f32.gmra.mrb[0].mxu0 %v190
        %v325 = vpop.f32.mrb[0].mxu0
        %v326 = vadd.f32 0.0, %v325
        %v327 = vpop.f32.mrb[0].mxu0
        %v328 = vadd.f32 0.0, %v327
        %329 = vdwg.mxu0
        %330 = vmatprep.subr.mxu0 0.0
        %331 = vmatpush1.msra.mxu0 %v197
        %332 = vmatprep.subr.mxu0 0.0
        %333 = vmatpush1.msra.mxu0 0.0
        %334 = vmatprep.subr.mxu0 0.0
        %335 = vmatpush1.msra.mxu0 0.0
        %336 = vmatprep.subr.mxu0 0.0
        %337 = vmatpush1.msra.mxu0 0.0
        %338 = vmatprep.subr.mxu0 0.0
        %339 = vmatpush1.msra.mxu0 0.0
        %340 = vmatprep.subr.mxu0 0.0
        %341 = vmatpush1.msra.mxu0 0.0
        %342 = vmatprep.subr.mxu0 0.0
        %343 = vmatpush1.msra.mxu0 0.0
        %344 = vmatprep.subr.mxu0 0.0
        %345 = vmatpush1.msra.mxu0 0.0
        %346 = vmatprep.subr.mxu0 0.0
        %347 = vmatpush1.msra.mxu0 0.0
        %348 = vmatprep.subr.mxu0 0.0
        %349 = vmatpush1.msra.mxu0 0.0
        %350 = vmatprep.subr.mxu0 0.0
        %351 = vmatpush1.msra.mxu0 0.0
        %352 = vmatprep.subr.mxu0 0.0
        %353 = vmatpush1.msra.mxu0 0.0
        %354 = vmatprep.subr.mxu0 0.0
        %355 = vmatpush1.msra.mxu0 0.0
        %356 = vmatprep.subr.mxu0 0.0
        %357 = vmatpush1.msra.mxu0 0.0
        %358 = vmatprep.subr.mxu0 0.0
        %359 = vmatpush1.msra.mxu0 0.0
        %360 = vmatprep.subr.mxu0 0.0
        %361 = vmatpush1.msra.mxu0 0.0
        %362 = vmatprep.subr.mxu0 0.0
        %363 = vmatpush1.msra.mxu0 0.0
        %364 = vmatprep.subr.mxu0 0.0
        %365 = vmatpush1.msra.mxu0 0.0
        %366 = vmatprep.subr.mxu0 0.0
        %367 = vmatpush1.msra.mxu0 0.0
        %368 = vmatprep.subr.mxu0 0.0
        %369 = vmatpush1.msra.mxu0 0.0
        %370 = vmatprep.subr.mxu0 0.0
        %371 = vmatpush1.msra.mxu0 0.0
        %372 = vmatprep.subr.mxu0 0.0
        %373 = vmatpush1.msra.mxu0 0.0
        %374 = vmatprep.subr.mxu0 0.0
        %375 = vmatpush1.msra.mxu0 0.0
        %376 = vmatprep.subr.mxu0 0.0
        %377 = vmatpush1.msra.mxu0 0.0
        %378 = vmatprep.subr.mxu0 0.0
        %379 = vmatpush1.msra.mxu0 0.0
        %380 = vmatprep.subr.mxu0 0.0
        %381 = vmatpush1.msra.mxu0 0.0
        %382 = vmatprep.subr.mxu0 0.0
        %383 = vmatpush1.msra.mxu0 0.0
        %384 = vmatprep.subr.mxu0 0.0
        %385 = vmatpush1.msra.mxu0 0.0
        %386 = vmatprep.subr.mxu0 0.0
        %387 = vmatpush1.msra.mxu0 0.0
        %388 = vmatprep.subr.mxu0 0.0
        %389 = vmatpush1.msra.mxu0 0.0
        %390 = vmatprep.subr.mxu0 0.0
        %391 = vmatpush1.msra.mxu0 0.0
        %392 = vmatprep.subr.mxu0 0.0
        %393 = vmatpush1.msra.mxu0 0.0
        %394 = vmatprep.mubr.f32.mxu0 0.0
        %395 = vmatmul.mubr.f32.gmra.mrb[0].mxu0 %v160
        %v396 = vpop.f32.mrb[0].mxu0
        %v397 = vadd.f32 0.0, %v396
        %v398 = vpop.f32.mrb[0].mxu0
        %399 = vmatprep.mubr.f32.mxu0 0.0
        %400 = vmatmul.mubr.f32.gmra.mrb[0].mxu0 %v163
        %v401 = vpop.f32.mrb[0].mxu0
        %v402 = vadd.f32 0.0, %v401
        %v403 = vpop.f32.mrb[0].mxu0
        %404 = vmatprep.mubr.f32.mxu0 0.0
        %405 = vmatmul.mubr.f32.gmra.mrb[0].mxu0 %v166
        %v406 = vpop.f32.mrb[0].mxu0
        %v407 = vadd.f32 0.0, %v406
        %v408 = vpop.f32.mrb[0].mxu0
        %409 = vmatprep.mubr.f32.mxu0 0.0
        %410 = vmatmul.mubr.f32.gmra.mrb[0].mxu0 %v169
        %v411 = vpop.f32.mrb[0].mxu0
        %v412 = vadd.f32 0.0, %v411
        %v413 = vpop.f32.mrb[0].mxu0
        %414 = vmatprep.mubr.f32.mxu0 0.0
        %415 = vmatmul.mubr.f32.gmra.mrb[0].mxu0 %v172
        %v416 = vpop.f32.mrb[0].mxu0
        %v417 = vadd.f32 0.0, %v416
        %v418 = vpop.f32.mrb[0].mxu0
        %419 = vmatprep.mubr.f32.mxu0 0.0
        %420 = vmatmul.mubr.f32.gmra.mrb[0].mxu0 %v175
        %v421 = vpop.f32.mrb[0].mxu0
        %v422 = vadd.f32 0.0, %v421
        %v423 = vpop.f32.mrb[0].mxu0
        %424 = vmatprep.mubr.f32.mxu0 0.0
        %425 = vmatmul.mubr.f32.gmra.mrb[0].mxu0 %v178
        %v426 = vpop.f32.mrb[0].mxu0
        %v427 = vadd.f32 0.0, %v426
        %v428 = vpop.f32.mrb[0].mxu0
        %429 = vmatprep.mubr.f32.mxu0 0.0
        %430 = vmatmul.mubr.f32.gmra.mrb[0].mxu0 %v181
        %v431 = vpop.f32.mrb[0].mxu0
        %v432 = vadd.f32 0.0, %v431
        %v433 = vpop.f32.mrb[0].mxu0
        %434 = vmatprep.mubr.f32.mxu0 0.0
        %435 = vmatmul.mubr.f32.gmra.mrb[0].mxu0 %v184
        %v436 = vpop.f32.mrb[0].mxu0
        %v437 = vadd.f32 0.0, %v436
        %v438 = vpop.f32.mrb[0].mxu0
        %439 = vmatprep.mubr.f32.mxu0 0.0
        %440 = vmatmul.mubr.f32.gmra.mrb[0].mxu0 %v187
        %v441 = vpop.f32.mrb[0].mxu0
        %v442 = vadd.f32 0.0, %v441
        %v443 = vpop.f32.mrb[0].mxu0
        %444 = vmatprep.mubr.f32.mxu0 0.0
        %445 = vmatmul.mubr.f32.gmra.mrb[0].mxu0 %v190
        %v446 = vpop.f32.mrb[0].mxu0
        %v447 = vadd.f32 0.0, %v446
        %v448 = vpop.f32.mrb[0].mxu0
        %449 = vdwg.mxu0
        %453 = vrot.lane.b32.xlu0 %v272, 19
        %v454 = vpop.permute.xlu0 %453
        %455 = vrot.lane.b32.xlu0 %v274, 19
        %v456 = vpop.permute.xlu0 %455
        %457 = vrot.lane.b32.xlu0 %v402, 19
        %v458 = vpop.permute.xlu0 %457
        %vm459 = vcmask 154624
        %v460 = vsel %vm459, %v454, %v456
        %v461 = vsel %vm459, %v456, %v458
        %v465 = vmul.f32 %v266, %v454
        %v466 = vmul.f32 %v268, %v460
        %v467 = vmul.f32 %v397, %v461
        %468 = vrot.lane.b32.xlu0 %v272, 18
        %v469 = vpop.permute.xlu0 %468
        %470 = vrot.lane.b32.xlu0 %v274, 18
        %v471 = vpop.permute.xlu0 %470
        %472 = vrot.lane.b32.xlu0 %v402, 18
        %v473 = vpop.permute.xlu0 %472
        %vm474 = vcmask 146432
        %v475 = vsel %vm474, %v469, %v471
        %v476 = vsel %vm474, %v471, %v473
        %v480 = vmul.f32 %v266, %v469
        %v481 = vmul.f32 %v268, %v475
        %v482 = vmul.f32 %v397, %v476
        %483 = vrot.lane.b32.xlu0 %v272, 17
        %v484 = vpop.permute.xlu0 %483
        %485 = vrot.lane.b32.xlu0 %v274, 17
        %v486 = vpop.permute.xlu0 %485
        %487 = vrot.lane.b32.xlu0 %v402, 17
        %v488 = vpop.permute.xlu0 %487
        %vm489 = vcmask 138240
        %v490 = vsel %vm489, %v484, %v486
        %v491 = vsel %vm489, %v486, %v488
        %v495 = vmul.f32 %v266, %v484
        %v496 = vmul.f32 %v268, %v490
        %v497 = vmul.f32 %v397, %v491
        %498 = vrot.lane.b32.xlu0 %v272, 1
        %v499 = vpop.permute.xlu0 %498
        %500 = vrot.lane.b32.xlu0 %v274, 1
        %v501 = vpop.permute.xlu0 %500
        %502 = vrot.lane.b32.xlu0 %v402, 1
        %v503 = vpop.permute.xlu0 %502
        %vm504 = vcmask 7168
        %v505 = vsel %vm504, %v499, %v501
        %v506 = vsel %vm504, %v501, %v503
        %v510 = vmul.f32 %v266, %v499
        %v511 = vmul.f32 %v268, %v505
        %v512 = vmul.f32 %v397, %v506
        %v513 = vmul.f32 %v266, %v272
        %v514 = vmul.f32 %v268, %v274
        %v515 = vmul.f32 %v397, %v402
        %516 = vrot.lane.b32.xlu0 %v272, 127
        %v517 = vpop.permute.xlu0 %516
        %518 = vrot.lane.b32.xlu0 %v274, 127
        %v519 = vpop.permute.xlu0 %518
        %520 = vrot.lane.b32.xlu0 %v402, 127
        %v521 = vpop.permute.xlu0 %520
        %vm522 = vcmask 1039360
        %v523 = vsel %vm522, %v517, %v519
        %v524 = vsel %vm522, %v519, %v521
        %v528 = vmul.f32 %v266, %v523
        %v529 = vmul.f32 %v268, %v524
        %v530 = vmul.f32 %v397, %v521
        %531 = vrot.lane.b32.xlu0 %v272, 111
        %v532 = vpop.permute.xlu0 %531
        %533 = vrot.lane.b32.xlu0 %v274, 111
        %v534 = vpop.permute.xlu0 %533
        %535 = vrot.lane.b32.xlu0 %v402, 111
        %v536 = vpop.permute.xlu0 %535
        %vm537 = vcmask 908288
        %v538 = vsel %vm537, %v532, %v534
        %v539 = vsel %vm537, %v534, %v536
        %v543 = vmul.f32 %v266, %v538
        %v544 = vmul.f32 %v268, %v539
        %v545 = vmul.f32 %v397, %v536
        %546 = vrot.lane.b32.xlu0 %v272, 110
        %v547 = vpop.permute.xlu0 %546
        %548 = vrot.lane.b32.xlu0 %v274, 110
        %v549 = vpop.permute.xlu0 %548
        %550 = vrot.lane.b32.xlu0 %v402, 110
        %v551 = vpop.permute.xlu0 %550
        %vm552 = vcmask 900096
        %v553 = vsel %vm552, %v547, %v549
        %v554 = vsel %vm552, %v549, %v551
        %v558 = vmul.f32 %v266, %v553
        %v559 = vmul.f32 %v268, %v554
        %v560 = vmul.f32 %v397, %v551
        %561 = vrot.lane.b32.xlu0 %v272, 109
        %v562 = vpop.permute.xlu0 %561
        %563 = vrot.lane.b32.xlu0 %v274, 109
        %v564 = vpop.permute.xlu0 %563
        %565 = vrot.lane.b32.xlu0 %v402, 109
        %v566 = vpop.permute.xlu0 %565
        %vm567 = vcmask 891904
        %v568 = vsel %vm567, %v562, %v564
        %v569 = vsel %vm567, %v564, %v566
        %v573 = vmul.f32 %v266, %v568
        %v574 = vmul.f32 %v268, %v569
        %v575 = vmul.f32 %v397, %v566
        %v576 = vmax.f32 %v465, %v480
        %v577 = vmax.f32 %v466, %v481
        %v578 = vmax.f32 %v467, %v482
        %v579 = vmax.f32 %v495, %v510
        %v580 = vmax.f32 %v496, %v511
        %v581 = vmax.f32 %v497, %v512
        %v582 = vmax.f32 %v513, %v528
        %v583 = vmax.f32 %v514, %v529
        %v584 = vmax.f32 %v515, %v530
        %v585 = vmax.f32 %v543, %v558
        %v586 = vmax.f32 %v544, %v559
        %v587 = vmax.f32 %v545, %v560
        %v588 = vmax.f32 %v576, %v579
        %v589 = vmax.f32 %v577, %v580
        %v590 = vmax.f32 %v578, %v581
        %v591 = vmax.f32 %v582, %v585
        %v592 = vmax.f32 %v583, %v586
        %v593 = vmax.f32 %v584, %v587
        %v594 = vmax.f32 %v588, %v591
        %v595 = vmax.f32 %v589, %v592
        %v596 = vmax.f32 %v590, %v593
        %v597 = vmax.f32 %v594, %v573
        %v598 = vmax.f32 %v595, %v574
        %v599 = vmax.f32 %v596, %v575
        %v600 = vsub.f32 %v465, %v597
        %v601 = vsub.f32 %v466, %v598
        %v602 = vsub.f32 %v467, %v599
        %v603 = vmul.f32 %v600, 1.442695
        %v604 = vpow.pop %v603
        %v605 = vmul.f32 %v601, 1.442695
        %v606 = vpow.pop %v605
        %v607 = vmul.f32 %v602, 1.442695
        %v608 = vpow.pop %v607
        %612 = vrot.lane.b32.xlu0 %v278, 19
        %v613 = vpop.permute.xlu0 %612
        %614 = vrot.lane.b32.xlu0 %v280, 19
        %v615 = vpop.permute.xlu0 %614
        %616 = vrot.lane.b32.xlu0 %v407, 19
        %v617 = vpop.permute.xlu0 %616
        %v618 = vsel %vm459, %v613, %v615
        %v619 = vsel %vm459, %v615, %v617
        %v623 = vmul.f32 %v604, %v613
        %v624 = vmul.f32 %v606, %v618
        %v625 = vmul.f32 %v608, %v619
        %v626 = vsub.f32 %v480, %v597
        %v627 = vsub.f32 %v481, %v598
        %v628 = vsub.f32 %v482, %v599
        %v629 = vmul.f32 %v626, 1.442695
        %v630 = vpow.pop %v629
        %v631 = vmul.f32 %v627, 1.442695
        %v632 = vpow.pop %v631
        %v633 = vmul.f32 %v628, 1.442695
        %v634 = vpow.pop %v633
        %v635 = vadd.f32 %v604, %v630
        %v636 = vadd.f32 %v606, %v632
        %v637 = vadd.f32 %v608, %v634
        %641 = vrot.lane.b32.xlu0 %v284, 18
        %v642 = vpop.permute.xlu0 %641
        %643 = vrot.lane.b32.xlu0 %v286, 18
        %v644 = vpop.permute.xlu0 %643
        %645 = vrot.lane.b32.xlu0 %v412, 18
        %v646 = vpop.permute.xlu0 %645
        %v647 = vsel %vm474, %v642, %v644
        %v648 = vsel %vm474, %v644, %v646
        %v652 = vmul.f32 %v630, %v642
        %v653 = vmul.f32 %v632, %v647
        %v654 = vmul.f32 %v634, %v648
        %v655 = vadd.f32 %v623, %v652
        %v656 = vadd.f32 %v624, %v653
        %v657 = vadd.f32 %v625, %v654
        %v658 = vsub.f32 %v495, %v597
        %v659 = vsub.f32 %v496, %v598
        %v660 = vsub.f32 %v497, %v599
        %v661 = vmul.f32 %v658, 1.442695
        %v662 = vpow.pop %v661
        %v663 = vmul.f32 %v659, 1.442695
        %v664 = vpow.pop %v663
        %v665 = vmul.f32 %v660, 1.442695
        %v666 = vpow.pop %v665
        %v667 = vadd.f32 %v635, %v662
        %v668 = vadd.f32 %v636, %v664
        %v669 = vadd.f32 %v637, %v666
        %673 = vrot.lane.b32.xlu0 %v290, 17
        %v674 = vpop.permute.xlu0 %673
        %675 = vrot.lane.b32.xlu0 %v292, 17
        %v676 = vpop.permute.xlu0 %675
        %677 = vrot.lane.b32.xlu0 %v417, 17
        %v678 = vpop.permute.xlu0 %677
        %v679 = vsel %vm489, %v674, %v676
        %v680 = vsel %vm489, %v676, %v678
        %v684 = vmul.f32 %v662, %v674
        %v685 = vmul.f32 %v664, %v679
        %v686 = vmul.f32 %v666, %v680
        %v687 = vadd.f32 %v655, %v684
        %v688 = vadd.f32 %v656, %v685
        %v689 = vadd.f32 %v657, %v686
        %v690 = vsub.f32 %v510, %v597
        %v691 = vsub.f32 %v511, %v598
        %v692 = vsub.f32 %v512, %v599
        %v693 = vmul.f32 %v690, 1.442695
        %v694 = vpow.pop %v693
        %v695 = vmul.f32 %v691, 1.442695
        %v696 = vpow.pop %v695
        %v697 = vmul.f32 %v692, 1.442695
        %v698 = vpow.pop %v697
        %v699 = vadd.f32 %v667, %v694
        %v700 = vadd.f32 %v668, %v696
        %v701 = vadd.f32 %v669, %v698
        %705 = vrot.lane.b32.xlu0 %v296, 1
        %v706 = vpop.permute.xlu0 %705
        %707 = vrot.lane.b32.xlu0 %v298, 1
        %v708 = vpop.permute.xlu0 %707
        %709 = vrot.lane.b32.xlu0 %v422, 1
        %v710 = vpop.permute.xlu0 %709
        %v711 = vsel %vm504, %v706, %v708
        %v712 = vsel %vm504, %v708, %v710
        %v716 = vmul.f32 %v694, %v706
        %v717 = vmul.f32 %v696, %v711
        %v718 = vmul.f32 %v698, %v712
        %v719 = vadd.f32 %v687, %v716
        %v720 = vadd.f32 %v688, %v717
        %v721 = vadd.f32 %v689, %v718
        %v722 = vsub.f32 %v513, %v597
        %v723 = vsub.f32 %v514, %v598
        %v724 = vsub.f32 %v515, %v599
        %v725 = vmul.f32 %v722, 1.442695
        %v726 = vpow.pop %v725
        %v727 = vmul.f32 %v723, 1.442695
        %v728 = vpow.pop %v727
        %v729 = vmul.f32 %v724, 1.442695
        %v730 = vpow.pop %v729
        %v731 = vadd.f32 %v699, %v726
        %v732 = vadd.f32 %v700, %v728
        %v733 = vadd.f32 %v701, %v730
        %v734 = vmul.f32 %v726, %v302
        %v735 = vmul.f32 %v728, %v304
        %v736 = vmul.f32 %v730, %v427
        %v737 = vadd.f32 %v719, %v734
        %v738 = vadd.f32 %v720, %v735
        %v739 = vadd.f32 %v721, %v736
        %v740 = vsub.f32 %v528, %v597
        %v741 = vsub.f32 %v529, %v598
        %v742 = vsub.f32 %v530, %v599
        %v743 = vmul.f32 %v740, 1.442695
        %v744 = vpow.pop %v743
        %v745 = vmul.f32 %v741, 1.442695
        %v746 = vpow.pop %v745
        %v747 = vmul.f32 %v742, 1.442695
        %v748 = vpow.pop %v747
        %v749 = vadd.f32 %v731, %v744
        %v750 = vadd.f32 %v732, %v746
        %v751 = vadd.f32 %v733, %v748
        %755 = vrot.lane.b32.xlu0 %v308, 127
        %v756 = vpop.permute.xlu0 %755
        %757 = vrot.lane.b32.xlu0 %v310, 127
        %v758 = vpop.permute.xlu0 %757
        %759 = vrot.lane.b32.xlu0 %v432, 127
        %v760 = vpop.permute.xlu0 %759
        %v761 = vsel %vm522, %v756, %v758
        %v762 = vsel %vm522, %v758, %v760
        %v766 = vmul.f32 %v744, %v761
        %v767 = vmul.f32 %v746, %v762
        %v768 = vmul.f32 %v748, %v760
        %v769 = vadd.f32 %v737, %v766
        %v770 = vadd.f32 %v738, %v767
        %v771 = vadd.f32 %v739, %v768
        %v772 = vsub.f32 %v543, %v597
        %v773 = vsub.f32 %v544, %v598
        %v774 = vsub.f32 %v545, %v599
        %v775 = vmul.f32 %v772, 1.442695
        %v776 = vpow.pop %v775
        %v777 = vmul.f32 %v773, 1.442695
        %v778 = vpow.pop %v777
        %v779 = vmul.f32 %v774, 1.442695
        %v780 = vpow.pop %v779
        %v781 = vadd.f32 %v749, %v776
        %v782 = vadd.f32 %v750, %v778
        %v783 = vadd.f32 %v751, %v780
        %787 = vrot.lane.b32.xlu0 %v314, 111
        %v788 = vpop.permute.xlu0 %787
        %789 = vrot.lane.b32.xlu0 %v316, 111
        %v790 = vpop.permute.xlu0 %789
        %791 = vrot.lane.b32.xlu0 %v437, 111
        %v792 = vpop.permute.xlu0 %791
        %v793 = vsel %vm537, %v788, %v790
        %v794 = vsel %vm537, %v790, %v792
        %v798 = vmul.f32 %v776, %v793
        %v799 = vmul.f32 %v778, %v794
        %v800 = vmul.f32 %v780, %v792
        %v801 = vadd.f32 %v769, %v798
        %v802 = vadd.f32 %v770, %v799
        %v803 = vadd.f32 %v771, %v800
        %v804 = vsub.f32 %v558, %v597
        %v805 = vsub.f32 %v559, %v598
        %v806 = vsub.f32 %v560, %v599
        %v807 = vmul.f32 %v804, 1.442695
        %v808 = vpow.pop %v807
        %v809 = vmul.f32 %v805, 1.442695
        %v810 = vpow.pop %v809
        %v811 = vmul.f32 %v806, 1.442695
        %v812 = vpow.pop %v811
        %v813 = vadd.f32 %v781, %v808
        %v814 = vadd.f32 %v782, %v810
        %v815 = vadd.f32 %v783, %v812
        %819 = vrot.lane.b32.xlu0 %v320, 110
        %v820 = vpop.permute.xlu0 %819
        %821 = vrot.lane.b32.xlu0 %v322, 110
        %v822 = vpop.permute.xlu0 %821
        %823 = vrot.lane.b32.xlu0 %v442, 110
        %v824 = vpop.permute.xlu0 %823
        %v825 = vsel %vm552, %v820, %v822
        %v826 = vsel %vm552, %v822, %v824
        %v830 = vmul.f32 %v808, %v825
        %v831 = vmul.f32 %v810, %v826
        %v832 = vmul.f32 %v812, %v824
        %v833 = vadd.f32 %v801, %v830
        %v834 = vadd.f32 %v802, %v831
        %v835 = vadd.f32 %v803, %v832
        %v836 = vsub.f32 %v573, %v597
        %v837 = vsub.f32 %v574, %v598
        %v838 = vsub.f32 %v575, %v599
        %v839 = vmul.f32 %v836, 1.442695
        %v840 = vpow.pop %v839
        %v841 = vmul.f32 %v837, 1.442695
        %v842 = vpow.pop %v841
        %v843 = vmul.f32 %v838, 1.442695
        %v844 = vpow.pop %v843
        %v845 = vadd.f32 %v813, %v840
        %v846 = vadd.f32 %v814, %v842
        %v847 = vadd.f32 %v815, %v844
        %851 = vrot.lane.b32.xlu0 %v326, 109
        %v852 = vpop.permute.xlu0 %851
        %853 = vrot.lane.b32.xlu0 %v328, 109
        %v854 = vpop.permute.xlu0 %853
        %855 = vrot.lane.b32.xlu0 %v447, 109
        %v856 = vpop.permute.xlu0 %855
        %v857 = vsel %vm567, %v852, %v854
        %v858 = vsel %vm567, %v854, %v856
        %v862 = vmul.f32 %v840, %v857
        %v863 = vmul.f32 %v842, %v858
        %v864 = vmul.f32 %v844, %v856
        %v865 = vadd.f32 %v833, %v862
        %v866 = vadd.f32 %v834, %v863
        %v867 = vadd.f32 %v835, %v864
        %v868 = vrcp.pop %v845
        %v869 = vrcp.pop %v846
        %v870 = vrcp.pop %v847
        %v871 = vmul.f32 %v865, %v868
        %v872 = vmul.f32 %v866, %v869
        %v873 = vmul.f32 %v867, %v870
        %877 = vrot.lane.b32.xlu0 %v871, 109
        %v878 = vpop.permute.xlu0 %877
        %879 = vrot.lane.b32.xlu0 %v872, 109
        %v880 = vpop.permute.xlu0 %879
        %881 = vrot.lane.b32.xlu0 %v873, 109
        %v882 = vpop.permute.xlu0 %881
        %v883 = vsel %vm567, %v878, %v880
        %v884 = vsel %vm567, %v880, %v882
        %888 = vst [vmem:[%s136] sm:$0xff] %v883
        %889 = vst [vmem:[%s136 + $0x8] sm:$0xff] %v884
        %vm890 = vcmask 261120
        %891 = vst.msk [vmem:[%s136 + $0x10] sm:$0xff] %vm890, %v882
        %s892 = sand.u32 %s71, 1
        %s893 = scalar_lea.sflag [#allocation3], %s892
        %s894 = sand.u32 %s71, 1
        %s895 = smul.addr %s894, 24
        %s896 = scalar_lea.vmem [#allocation2], %s895
        // Predicated region
        $region29: #{tpu_custom_call.1} parent=27 // pred_check
          %p897 = pneg %p81
        $region30: #{tpu_custom_call.1} parent=27 // pred_check_branch
          %899 = sbr.rel (%p897) target = $region32
        $region31: #{tpu_custom_call.1} parent=27 // pred_region
          %s901 = ssub.s32 384, 384
          %902 = vsyncadd %s893, %s901
          %s903 = smul.addr %s16, 3
          %s904 = smul.addr %s903, 128
          %s905 = scalar_lea.hbm %s2, %s904
          %s907 = sshll.u32 %s896, 4
          %s908 = int_to_ptr.vmem [resolvable:$true] %s907
          %910 = dma.vmem_to_hbm [thread:$0]  %s908, 384, %s905, %s893
        $region32: #{tpu_custom_call.1} parent=27 // pred_fallthru
          _
      $region28: #{tpu_custom_call.1} parent=5 // pred_fallthru
        _
      %p911 = scmp.le.s32.totalorder 2, %s11
      // Predicated region
      $region33: #{tpu_custom_call.1} parent=5 // pred_check
        %p912 = pneg %p911
      $region34: #{tpu_custom_call.1} parent=5 // pred_check_branch
        %914 = sbr.rel (%p912) target = $region36
      $region35: #{tpu_custom_call.1} parent=5 // pred_region
        %s915 = ssub.s32 %s11, 2
        // Predicated region
        $region37: #{tpu_custom_call.1} parent=35 // pred_check
          %p916 = pneg %p87
        $region38: #{tpu_custom_call.1} parent=35 // pred_check_branch
          %918 = sbr.rel (%p916) target = $region40
        $region39: #{tpu_custom_call.1} parent=35 // pred_region
          %s919 = sand.u32 %s72, 1
          %s920 = scalar_lea.sflag [#allocation3], %s919
          %s921 = sand.u32 %s72, 1
          %s922 = smul.addr %s921, 24
          %s923 = scalar_lea.vmem [#allocation2], %s922
          %924 = dma.done %s920, 384
        $region40: #{tpu_custom_call.1} parent=35 // pred_fallthru
          _
      $region36: #{tpu_custom_call.1} parent=5 // pred_fallthru
        _
    $region6: #{tpu_custom_call.1} parent=1 // loop_footer
      %s15 = sadd.s32 1, %s11
    $region7: #{tpu_custom_call.1} parent=1 // loop_footer_branch
      %10 = sbr.rel target = $region3
    $region8: #{tpu_custom_call.1} parent=1 // loop_exit
      _
    %925 = vsyncpa [#allocation3], 1
    %s926 = scalar_lea.sflag [#allocation3], 1
    %927 = vsyncpa %s926, 1

</llo_original>
